<compile_context>
chip_gen: v7x
topology: tpu7x:2x2x1
jax: 0.10.0
libtpu: 0.0.40
codegen_flags: <defaults>
</compile_context>

<pallas_src>
import functools

import jax
import jax.numpy as jnp
from jax import lax
from jax.experimental import pallas as pl
from jax.experimental.pallas import tpu as pltpu


def _round_up(x, m):
    return ((x + m - 1) // m) * m


# --------------------- kernel 1: fused QKV projection ---------------------
def _qkv_proj_kernel(x_ref, wq_ref, wk_ref, wv_ref, bq_ref, bk_ref, bv_ref,
                     q_ref, kt_ref, v_ref, *, scale):
    # x_ref: (blk, Ep) f32;  w*: (Ep, Hp) f32;  b*: (1, Hp) f32
    # q_ref: (blk, Hp) bf16 (pre-scaled), kt_ref: (Hp, blk) bf16, v_ref: (blk, Hp) bf16
    x = x_ref[...]
    q = jnp.dot(x, wq_ref[...], preferred_element_type=jnp.float32) + bq_ref[...]
    q_ref[...] = (q * scale).astype(q_ref.dtype)          # fold 1/sqrt(n_embd) into Q
    k = jnp.dot(x, wk_ref[...], preferred_element_type=jnp.float32) + bk_ref[...]
    kt_ref[...] = k.T.astype(kt_ref.dtype)                # transpose once, amortized
    v = jnp.dot(x, wv_ref[...], preferred_element_type=jnp.float32) + bv_ref[...]
    v_ref[...] = v.astype(v_ref.dtype)


# ------------- kernel 2: causal flash attention (online softmax) ----------
def _flash_attn_kernel(q_ref, kt_ref, v_ref, o_ref, m_sc, l_sc, acc_sc, *, blk):
    # q_ref: (blk, Hp) bf16, kt_ref: (Hp, blk) bf16, v_ref: (blk, Hp) bf16
    # scratch: m_sc/l_sc (blk, 1) f32, acc_sc (blk, Hp) f32
    i = pl.program_id(1)   # query block index
    j = pl.program_id(2)   # kv block index (reduction axis, last in grid)

    @pl.when(j == 0)
    def _():
        m_sc[...] = jnp.full_like(m_sc, -jnp.inf)
        l_sc[...] = jnp.zeros_like(l_sc)
        acc_sc[...] = jnp.zeros_like(acc_sc)

    def _update(masked):
        # bf16 operands, f32 accumulation; scale already folded into q.
        s = jnp.dot(q_ref[...], kt_ref[...], preferred_element_type=jnp.float32)
        if masked:
            # Diagonal block: local causal mask (also masks zero-padded key columns,
            # which only ever appear in the last kv block == last diagonal block).
            r = lax.broadcasted_iota(jnp.int32, (blk, blk), 0)
            c = lax.broadcasted_iota(jnp.int32, (blk, blk), 1)
            s = jnp.where(c <= r, s, -jnp.inf)
        m_prev = m_sc[...]
        m_new = jnp.maximum(m_prev, jnp.max(s, axis=-1, keepdims=True))
        alpha = jnp.exp(m_prev - m_new)
        p = jnp.exp(s - m_new)
        l_sc[...] = alpha * l_sc[...] + jnp.sum(p, axis=-1, keepdims=True)
        acc_sc[...] = alpha * acc_sc[...] + jnp.dot(
            p.astype(v_ref.dtype), v_ref[...], preferred_element_type=jnp.float32)
        m_sc[...] = m_new

    @pl.when(j < i)          # strictly below the diagonal: no mask needed
    def _():
        _update(masked=False)

    @pl.when(j == i)         # diagonal block: apply in-block causal mask
    def _():
        _update(masked=True)

    # j > i contributes nothing (causality); its K/V DMA is elided by the clamped
    # index_map, and no compute runs.

    @pl.when(j == pl.num_programs(2) - 1)
    def _():
        o_ref[...] = (acc_sc[...] *
                      pl.reciprocal(l_sc[...], approx=True)).astype(o_ref.dtype)
        # TODO(synk): nn.Dropout(p) on the attention matrix is identity in eval mode;
        # training-mode stochastic masking (pltpu.prng_seed + bernoulli) not applied.


def causal_attention_head(x, wq, bq, wk, bk, wv, bv, *, block=256):
    """x: (B, T, n_embd); w*: (n_embd, head_size); b*: (head_size,) -> (B, T, head_size)."""
    B, T, E = x.shape
    Hs = wq.shape[1]
    scale = float(E) ** -0.5          # PyTorch module scales by d**-0.5 with d = n_embd

    LANE, SUB = 128, 8
    block = _round_up(block, LANE)    # tiles that don't cover the full seq must be 128-mult
    t8 = _round_up(T, SUB)
    blk = t8 if t8 <= block else block
    Tp = _round_up(T, blk)            # padded sequence length
    Ep = _round_up(E, LANE)           # lane-dense embed dim
    Hp = _round_up(Hs, LANE)          # lane-dense head dim
    nb = Tp // blk

    # Zero padding is exact: padded feature/head columns add 0 to every dot product,
    # padded key rows only occur in the last (diagonal) block and are masked there,
    # padded query rows are sliced off at the end.
    xp = jnp.pad(x, ((0, 0), (0, Tp - T), (0, Ep - E)))

    def pad_w(w):
        return jnp.pad(w, ((0, Ep - E), (0, Hp - Hs)))

    def pad_b(b):
        return jnp.pad(b, ((0, Hp - Hs),)).reshape(1, Hp)

    wq_p, wk_p, wv_p = pad_w(wq), pad_w(wk), pad_w(wv)
    bq_p, bk_p, bv_p = pad_b(bq), pad_b(bk), pad_b(bv)

    # ---- kernel 1: fused QKV projection (bf16 outputs, K pre-transposed) ----
    q, kt, v = pl.pallas_call(
        functools.partial(_qkv_proj_kernel, scale=scale),
        out_shape=(
            jax.ShapeDtypeStruct((B, Tp, Hp), jnp.bfloat16),   # q (pre-scaled)
            jax.ShapeDtypeStruct((B, Hp, Tp), jnp.bfloat16),   # k^T
            jax.ShapeDtypeStruct((B, Tp, Hp), jnp.bfloat16),   # v
        ),
        grid_spec=pltpu.PrefetchScalarGridSpec(
            num_scalar_prefetch=0,
            grid=(B, nb),
            in_specs=[
                pl.BlockSpec((None, blk, Ep), lambda b, i: (b, i, 0)),   # x token tile
                pl.BlockSpec((Ep, Hp), lambda b, i: (0, 0)),
                pl.BlockSpec((Ep, Hp), lambda b, i: (0, 0)),
                pl.BlockSpec((Ep, Hp), lambda b, i: (0, 0)),
                pl.BlockSpec((1, Hp), lambda b, i: (0, 0)),
                pl.BlockSpec((1, Hp), lambda b, i: (0, 0)),
                pl.BlockSpec((1, Hp), lambda b, i: (0, 0)),
            ],
            out_specs=(
                pl.BlockSpec((None, blk, Hp), lambda b, i: (b, i, 0)),
                pl.BlockSpec((None, Hp, blk), lambda b, i: (b, 0, i)),
                pl.BlockSpec((None, blk, Hp), lambda b, i: (b, i, 0)),
            ),
        ),
        compiler_params=pltpu.CompilerParams(
            dimension_semantics=("parallel", "parallel"),
            vmem_limit_bytes=32 * 1024 * 1024),
    )(xp, wq_p, wk_p, wv_p, bq_p, bk_p, bv_p)

    # ---- kernel 2: causal flash attention with online softmax ----
    out = pl.pallas_call(
        functools.partial(_flash_attn_kernel, blk=blk),
        out_shape=jax.ShapeDtypeStruct((B, Tp, Hp), x.dtype),
        grid_spec=pltpu.PrefetchScalarGridSpec(
            num_scalar_prefetch=0,
            grid=(B, nb, nb),                      # reduction (kv) axis last
            in_specs=[
                pl.BlockSpec((None, blk, Hp), lambda b, i, j: (b, i, 0)),          # Q
                # Clamp j -> min(j, i): the predicated-off upper-triangle steps reuse
                # the block already resident in VMEM, so their DMAs are elided.
                pl.BlockSpec((None, Hp, blk),
                             lambda b, i, j: (b, 0, jnp.minimum(j, i))),           # K^T
                pl.BlockSpec((None, blk, Hp),
                             lambda b, i, j: (b, jnp.minimum(j, i), 0)),           # V
            ],
            out_specs=pl.BlockSpec((None, blk, Hp), lambda b, i, j: (b, i, 0)),
            scratch_shapes=[
                pltpu.VMEM((blk, 1), jnp.float32),    # running max m
                pltpu.VMEM((blk, 1), jnp.float32),    # running denom l
                pltpu.VMEM((blk, Hp), jnp.float32),   # output accumulator
            ],
        ),
        compiler_params=pltpu.CompilerParams(
            dimension_semantics=("parallel", "parallel", "arbitrary"),
            vmem_limit_bytes=32 * 1024 * 1024),
    )(q, kt, v)

    return out[:, :T, :Hs]


if __name__ == "__main__":
    # Small shapes consistent with the module: batch=2, seq=8, n_embd=32, head_size=16.
    B, T = 2, 8
    n_embd = 32
    head_size = 16
    cw_size = 8        # context window (>= T); mask generated in-kernel via iota
    p_dropout = 0.1    # identity at inference

    key = jax.random.PRNGKey(0)
    kx, k1, k2, k3, k4, k5, k6 = jax.random.split(key, 7)
    x = jax.random.normal(kx, (B, T, n_embd), jnp.float32)

    lim = 1.0 / jnp.sqrt(n_embd)   # nn.Linear default init bound
    wq = jax.random.uniform(k1, (n_embd, head_size), jnp.float32, -lim, lim)
    wk = jax.random.uniform(k2, (n_embd, head_size), jnp.float32, -lim, lim)
    wv = jax.random.uniform(k3, (n_embd, head_size), jnp.float32, -lim, lim)
    bq = jax.random.uniform(k4, (head_size,), jnp.float32, -lim, lim)
    bk = jax.random.uniform(k5, (head_size,), jnp.float32, -lim, lim)
    bv = jax.random.uniform(k6, (head_size,), jnp.float32, -lim, lim)

    out = causal_attention_head(x, wq, bq, wk, bk, wv, bv)
    out = jax.block_until_ready(out)

    # Pure-JAX f32 reference (same math as the PyTorch module in eval mode).
    q = x @ wq + bq
    k = x @ wk + bk
    v = x @ wv + bv
    att = jnp.einsum("btd,bsd->bts", q, k) * (float(n_embd) ** -0.5)
    mask = jnp.tril(jnp.ones((T, T), dtype=bool))
    att = jnp.where(mask[None, :, :], att, -jnp.inf)
    att = jax.nn.softmax(att, axis=-1)
    ref = jnp.einsum("bts,bsd->btd", att, v)

    assert out.shape == (B, T, head_size)
    # bf16 MXU operands (f32 accumulation) -> relaxed tolerance vs. the f32 reference.
    err = float(jnp.max(jnp.abs(out - ref)))
    assert err < 5e-2, err

    print("KERNEL_OK")
</pallas_src>

<mosaic_0001>
module attributes {stable_mosaic.version = 11 : i64} {
  func.func @_qkv_proj_kernel(%arg0: i32, %arg1: i32, %arg2: memref<1x8x128xf32, #tpu.memory_space<vmem>>, %arg3: memref<128x128xf32, #tpu.memory_space<vmem>>, %arg4: memref<128x128xf32, #tpu.memory_space<vmem>>, %arg5: memref<128x128xf32, #tpu.memory_space<vmem>>, %arg6: memref<1x128xf32, #tpu.memory_space<vmem>>, %arg7: memref<1x128xf32, #tpu.memory_space<vmem>>, %arg8: memref<1x128xf32, #tpu.memory_space<vmem>>, %arg9: memref<1x8x128xbf16, #tpu.memory_space<vmem>>, %arg10: memref<1x128x8xbf16, #tpu.memory_space<vmem>>, %arg11: memref<1x8x128xbf16, #tpu.memory_space<vmem>>) attributes {dimension_semantics = [#tpu.dimension_semantics<parallel>, #tpu.dimension_semantics<parallel>], iteration_bounds = array<i64: 2, 1>, scalar_prefetch = 0 : i64, scratch_operands = 0 : i64, tpu.core_type = #tpu.core_type<tc>, window_params = [{transform_indices = @transform_0, window_bounds = array<i64: 1, 8, 128>}, {pipeline_mode = #tpu.pipeline_mode<synchronous>, transform_indices = @transform_1, window_bounds = array<i64: 128, 128>}, {pipeline_mode = #tpu.pipeline_mode<synchronous>, transform_indices = @transform_2, window_bounds = array<i64: 128, 128>}, {pipeline_mode = #tpu.pipeline_mode<synchronous>, transform_indices = @transform_3, window_bounds = array<i64: 128, 128>}, {pipeline_mode = #tpu.pipeline_mode<synchronous>, transform_indices = @transform_4, window_bounds = array<i64: 1, 128>}, {pipeline_mode = #tpu.pipeline_mode<synchronous>, transform_indices = @transform_5, window_bounds = array<i64: 1, 128>}, {pipeline_mode = #tpu.pipeline_mode<synchronous>, transform_indices = @transform_6, window_bounds = array<i64: 1, 128>}, {transform_indices = @transform_7, window_bounds = array<i64: 1, 8, 128>}, {transform_indices = @transform_8, window_bounds = array<i64: 1, 128, 8>}, {transform_indices = @transform_9, window_bounds = array<i64: 1, 8, 128>}]} {
    %c0 = arith.constant 0 : index
    %c0_0 = arith.constant 0 : index
    %c0_1 = arith.constant 0 : index
    %0 = vector.load %arg2[%c0, %c0_0, %c0_1] : memref<1x8x128xf32, #tpu.memory_space<vmem>>, vector<1x8x128xf32>
    %1 = vector.shape_cast %0 : vector<1x8x128xf32> to vector<8x128xf32>
    %c0_2 = arith.constant 0 : index
    %c0_3 = arith.constant 0 : index
    %2 = vector.load %arg3[%c0_2, %c0_3] : memref<128x128xf32, #tpu.memory_space<vmem>>, vector<128x128xf32>
    %cst = arith.constant dense<0.000000e+00> : vector<8x128xf32>
    %3 = tpu.matmul %1, %2, %cst {dimension_numbers = #tpu.dot_dimension_numbers<[1], [0], [0], [1], [0, 0, 1, 1], [], []>} : vector<8x128xf32>, vector<128x128xf32>, vector<8x128xf32> -> vector<8x128xf32>
    %c0_4 = arith.constant 0 : index
    %c0_5 = arith.constant 0 : index
    %4 = vector.load %arg6[%c0_4, %c0_5] : memref<1x128xf32, #tpu.memory_space<vmem>>, vector<1x128xf32>
    %5 = vector.broadcast %4 : vector<1x128xf32> to vector<8x128xf32>
    %6 = arith.addf %3, %5 : vector<8x128xf32>
    %cst_6 = arith.constant 0.176776692 : f32
    %7 = vector.broadcast %cst_6 : f32 to vector<8x128xf32>
    %8 = arith.mulf %6, %7 : vector<8x128xf32>
    %9 = arith.truncf %8 : vector<8x128xf32> to vector<8x128xbf16>
    %c0_7 = arith.constant 0 : index
    %c0_8 = arith.constant 0 : index
    %c0_9 = arith.constant 0 : index
    %10 = vector.load %arg9[%c0_7, %c0_8, %c0_9] : memref<1x8x128xbf16, #tpu.memory_space<vmem>>, vector<1x8x128xbf16>
    %11 = vector.shape_cast %10 : vector<1x8x128xbf16> to vector<8x128xbf16>
    %12 = vector.shape_cast %9 : vector<8x128xbf16> to vector<1x8x128xbf16>
    tpu.vector_store %arg9[%c0_7, %c0_8, %c0_9], %12 {strides = array<i32>} : memref<1x8x128xbf16, #tpu.memory_space<vmem>>, vector<1x8x128xbf16>,
    %c0_10 = arith.constant 0 : index
    %c0_11 = arith.constant 0 : index
    %13 = vector.load %arg4[%c0_10, %c0_11] : memref<128x128xf32, #tpu.memory_space<vmem>>, vector<128x128xf32>
    %cst_12 = arith.constant dense<0.000000e+00> : vector<8x128xf32>
    %14 = tpu.matmul %1, %13, %cst_12 {dimension_numbers = #tpu.dot_dimension_numbers<[1], [0], [0], [1], [0, 0, 1, 1], [], []>} : vector<8x128xf32>, vector<128x128xf32>, vector<8x128xf32> -> vector<8x128xf32>
    %c0_13 = arith.constant 0 : index
    %c0_14 = arith.constant 0 : index
    %15 = vector.load %arg7[%c0_13, %c0_14] : memref<1x128xf32, #tpu.memory_space<vmem>>, vector<1x128xf32>
    %16 = vector.broadcast %15 : vector<1x128xf32> to vector<8x128xf32>
    %17 = arith.addf %14, %16 : vector<8x128xf32>
    %18 = tpu.transpose %17, [1, 0] : vector<8x128xf32> -> vector<128x8xf32>
    %19 = arith.truncf %18 : vector<128x8xf32> to vector<128x8xbf16>
    %c0_15 = arith.constant 0 : index
    %c0_16 = arith.constant 0 : index
    %c0_17 = arith.constant 0 : index
    %20 = vector.load %arg10[%c0_15, %c0_16, %c0_17] : memref<1x128x8xbf16, #tpu.memory_space<vmem>>, vector<1x128x8xbf16>
    %21 = vector.shape_cast %20 : vector<1x128x8xbf16> to vector<128x8xbf16>
    %22 = vector.shape_cast %19 : vector<128x8xbf16> to vector<1x128x8xbf16>
    tpu.vector_store %arg10[%c0_15, %c0_16, %c0_17], %22 {strides = array<i32>} : memref<1x128x8xbf16, #tpu.memory_space<vmem>>, vector<1x128x8xbf16>,
    %c0_18 = arith.constant 0 : index
    %c0_19 = arith.constant 0 : index
    %23 = vector.load %arg5[%c0_18, %c0_19] : memref<128x128xf32, #tpu.memory_space<vmem>>, vector<128x128xf32>
    %cst_20 = arith.constant dense<0.000000e+00> : vector<8x128xf32>
    %24 = tpu.matmul %1, %23, %cst_20 {dimension_numbers = #tpu.dot_dimension_numbers<[1], [0], [0], [1], [0, 0, 1, 1], [], []>} : vector<8x128xf32>, vector<128x128xf32>, vector<8x128xf32> -> vector<8x128xf32>
    %c0_21 = arith.constant 0 : index
    %c0_22 = arith.constant 0 : index
    %25 = vector.load %arg8[%c0_21, %c0_22] : memref<1x128xf32, #tpu.memory_space<vmem>>, vector<1x128xf32>
    %26 = vector.broadcast %25 : vector<1x128xf32> to vector<8x128xf32>
    %27 = arith.addf %24, %26 : vector<8x128xf32>
    %28 = arith.truncf %27 : vector<8x128xf32> to vector<8x128xbf16>
    %c0_23 = arith.constant 0 : index
    %c0_24 = arith.constant 0 : index
    %c0_25 = arith.constant 0 : index
    %29 = vector.load %arg11[%c0_23, %c0_24, %c0_25] : memref<1x8x128xbf16, #tpu.memory_space<vmem>>, vector<1x8x128xbf16>
    %30 = vector.shape_cast %29 : vector<1x8x128xbf16> to vector<8x128xbf16>
    %31 = vector.shape_cast %28 : vector<8x128xbf16> to vector<1x8x128xbf16>
    tpu.vector_store %arg11[%c0_23, %c0_24, %c0_25], %31 {strides = array<i32>} : memref<1x8x128xbf16, #tpu.memory_space<vmem>>, vector<1x8x128xbf16>,
    return
  }
  func.func @transform_0(%arg0: i32, %arg1: i32) -> (i32, i32, i32) {
    %c0_i32 = arith.constant 0 : i32
    %c0_i32_0 = arith.constant 0 : i32
    return %arg0, %arg1, %c0_i32 : i32, i32, i32
  }
  func.func @transform_1(%arg0: i32, %arg1: i32) -> (i32, i32) {
    %c0_i32 = arith.constant 0 : i32
    %c0_i32_0 = arith.constant 0 : i32
    %c0_i32_1 = arith.constant 0 : i32
    return %c0_i32, %c0_i32_0 : i32, i32
  }
  func.func @transform_2(%arg0: i32, %arg1: i32) -> (i32, i32) {
    %c0_i32 = arith.constant 0 : i32
    %c0_i32_0 = arith.constant 0 : i32
    %c0_i32_1 = arith.constant 0 : i32
    return %c0_i32, %c0_i32_0 : i32, i32
  }
  func.func @transform_3(%arg0: i32, %arg1: i32) -> (i32, i32) {
    %c0_i32 = arith.constant 0 : i32
    %c0_i32_0 = arith.constant 0 : i32
    %c0_i32_1 = arith.constant 0 : i32
    return %c0_i32, %c0_i32_0 : i32, i32
  }
  func.func @transform_4(%arg0: i32, %arg1: i32) -> (i32, i32) {
    %c0_i32 = arith.constant 0 : i32
    %c0_i32_0 = arith.constant 0 : i32
    %c0_i32_1 = arith.constant 0 : i32
    return %c0_i32, %c0_i32_0 : i32, i32
  }
  func.func @transform_5(%arg0: i32, %arg1: i32) -> (i32, i32) {
    %c0_i32 = arith.constant 0 : i32
    %c0_i32_0 = arith.constant 0 : i32
    %c0_i32_1 = arith.constant 0 : i32
    return %c0_i32, %c0_i32_0 : i32, i32
  }
  func.func @transform_6(%arg0: i32, %arg1: i32) -> (i32, i32) {
    %c0_i32 = arith.constant 0 : i32
    %c0_i32_0 = arith.constant 0 : i32
    %c0_i32_1 = arith.constant 0 : i32
    return %c0_i32, %c0_i32_0 : i32, i32
  }
  func.func @transform_7(%arg0: i32, %arg1: i32) -> (i32, i32, i32) {
    %c0_i32 = arith.constant 0 : i32
    %c0_i32_0 = arith.constant 0 : i32
    return %arg0, %arg1, %c0_i32 : i32, i32, i32
  }
  func.func @transform_8(%arg0: i32, %arg1: i32) -> (i32, i32, i32) {
    %c0_i32 = arith.constant 0 : i32
    %c0_i32_0 = arith.constant 0 : i32
    return %arg0, %c0_i32, %arg1 : i32, i32, i32
  }
  func.func @transform_9(%arg0: i32, %arg1: i32) -> (i32, i32, i32) {
    %c0_i32 = arith.constant 0 : i32
    %c0_i32_0 = arith.constant 0 : i32
    return %arg0, %arg1, %c0_i32 : i32, i32, i32
  }
}

</mosaic_0001>

<llo_original>
// kernel: tpu_custom_call.1
$region0: #{tpu_custom_call.1}
  #allocation0 [shape = 'u32[]', space=smem, size = 0x4, offset = 0x4, fixed_abs, tag = 'smem constant byte address 0x4 - core index']
  #allocation1 [shape = 'u32[144,128]{1,0:T(1,128)}', space=vmem, size = 0x12000, scoped, tag = 'internal scratch']
  %s0 = inlined_call_operand.hbm [shape: f32[2,8,128], index: 0, kind: input, shape index: {}]
  %s1 = inlined_call_operand.hbm [shape: f32[128,128], index: 1, kind: input, shape index: {}]
  %s2 = inlined_call_operand.hbm [shape: f32[128,128], index: 2, kind: input, shape index: {}]
  %s3 = inlined_call_operand.hbm [shape: f32[128,128], index: 3, kind: input, shape index: {}]
  %s4 = inlined_call_operand.vmem [shape: f32[1,128], index: 4, kind: input, shape index: {}]
  %s5 = inlined_call_operand.vmem [shape: f32[1,128], index: 5, kind: input, shape index: {}]
  %s6 = inlined_call_operand.vmem [shape: f32[1,128], index: 6, kind: input, shape index: {}]
  %s7 = inlined_call_operand.hbm [shape: bf16[2,8,128], index: 7, kind: output, shape index: {0}]
  %s8 = inlined_call_operand.vmem [shape: bf16[2,128,8], index: 8, kind: output, shape index: {1}]
  %s9 = inlined_call_operand.hbm [shape: bf16[2,8,128], index: 9, kind: output, shape index: {2}]
  %10 = xla_tuple %s7, %s8, %s9
  %s11 = sld [smem:[#allocation0]]
  $region93: #{tpu_custom_call.1} parent=0
    _
  %s13 = ssub.s32 1, %s11
  %s14 = scalar_select 0, %s13, %s11
  $region1: #{tpu_custom_call.1} parent=0
    #allocation2 [shape = 'u8[8192]{0}', space=vmem, size = 0x2000, scoped, tag = 'input window, operand 0']
    #allocation3 [shape = 's32[2]{0}', space=sflag, size = 0x8, scoped, tag = 'scoped memory for tpu_custom_call.1']
    #allocation4 [shape = 's32[2]{0}', space=sflag, size = 0x8, scoped, tag = 'scoped memory for tpu_custom_call.1']
    #allocation5 [shape = 'u8[65536]{0}', space=vmem, size = 0x10000, scoped, tag = 'input window, operand 1, single buffered']
    #allocation6 [shape = 's32[1]{0}', space=sflag, size = 0x4, scoped, tag = 'scoped memory for tpu_custom_call.1']
    #allocation7 [shape = 'u8[65536]{0}', space=vmem, size = 0x10000, scoped, tag = 'input window, operand 2, single buffered']
    #allocation8 [shape = 'u8[65536]{0}', space=vmem, size = 0x10000, scoped, tag = 'input window, operand 3, single buffered']
    #allocation9 [shape = 's32[1]{0}', space=sflag, size = 0x4, scoped, tag = 'scoped memory for tpu_custom_call.1']
    #allocation10 [shape = 'u8[4096]{0}', space=vmem, size = 0x1000, scoped, tag = 'output window, operand 0']
    #allocation11 [shape = 'u8[4096]{0}', space=vmem, size = 0x1000, scoped, tag = 'output window, operand 2']
    #allocation12 [shape = 's32[2]{0}', space=sflag, size = 0x8, scoped, tag = 'scoped memory for tpu_custom_call.1']
    %15 = vsyncpa [#allocation3], 0
    %s16 = scalar_lea.sflag [#allocation3], 1
    %17 = vsyncpa %s16, 0
    %18 = vsyncpa [#allocation6], 0
    %19 = vsyncpa [#allocation9], 0
    %20 = vsyncpa [#allocation4], 0
    %s21 = scalar_lea.sflag [#allocation4], 1
    %22 = vsyncpa %s21, 0
    %23 = vsyncpa [#allocation12], 0
    %s24 = scalar_lea.sflag [#allocation12], 1
    %25 = vsyncpa %s24, 0
    loop: start=0, step=1, limit=4
    $region2: #{tpu_custom_call.1} parent=1 // loop_pre_header
      _
    $region3: #{tpu_custom_call.1} parent=1 // loop_header
      %s27 = sphi 0, %s31
      %p28 = scmp.ge.s32.totalorder %s27, 4
      %s34 = sphi 0, %s46
      %s35 = sphi 0, %s42
      %s36 = sphi 0, %s34
      %s37 = sphi 0, %s35
      %s38 = sphi 0, %s36
      %s39 = sphi 0, %s37
      %s51 = sphi 0, %s53
      %s54 = sphi 0, %s51
      %s55 = sphi 0, %s54
      %s71 = sphi 0, %s55
      %s75 = sphi 0, %s75
      %s77 = sphi 0, %s75
      %s78 = sphi 0, %s77
      %s92 = sphi 0, %s78
      %s96 = sphi 0, %s96
      %s98 = sphi 0, %s96
      %s99 = sphi 0, %s98
      %s113 = sphi 0, %s99
      %s117 = sphi 0, %s117
      %s119 = sphi 0, %s117
      %s120 = sphi 0, %s119
      %s134 = sphi 0, %s120
      %s138 = sphi 0, %s138
      %s140 = sphi 0, %s138
      %s141 = sphi 0, %s140
      %s155 = sphi 0, %s141
      %s159 = sphi 0, %s159
      %s161 = sphi 0, %s159
      %s162 = sphi 0, %s161
      %s176 = sphi 0, %s162
      %s180 = sphi 0, %s180
      %s182 = sphi 0, %s180
      %s183 = sphi 0, %s182
      %s197 = sphi 0, %s183
      %s205 = sphi 0, %s207
      %s208 = sphi 0, %s205
      %s209 = sphi 0, %s208
      %s225 = sphi 0, %s209
      %s233 = sphi 0, %s235
      %s236 = sphi 0, %s233
      %s237 = sphi 0, %s236
      %s253 = sphi 0, %s237
      %s261 = sphi 0, %s263
      %s264 = sphi 0, %s261
      %s265 = sphi 0, %s264
      %s281 = sphi 0, %s265
    $region4: #{tpu_custom_call.1} parent=1 // loop_header_branch
      %30 = sbr.rel (%p28) target = $region8
    $region5: #{tpu_custom_call.1} parent=1 // loop_body
      %s32 = ssub.s32 %s27, 1
      %s33 = ssub.s32 %s27, 2
      %s40 = sadd.s32 1, %s35
      %p41 = scmp.ge.s32.totalorder %s40, 1
      %s42 = scalar_select %p41, 0, %s40
      %s43 = sadd.s32 1, %s34
      %s44 = scalar_select %p41, %s43, %s34
      %p45 = scmp.ge.s32.totalorder %s44, 2
      %s46 = scalar_select %p45, 0, %s44
      %s47 = ssub.s32 %s34, %s46
      %s48 = ssub.s32 %s35, %s42
      %s49 = sor.u32 %s47, %s48
      %p50 = scmp.eq.s32.totalorder %s49, 0
      %s52 = sadd.s32 %s51, 1
      %s53 = scalar_select %p50, %s51, %s52
      %p56 = pneg %p50
      %p57 = scmp.eq.s32.totalorder %s27, 1
      %p58 = por %p56, %p57
      %p59 = scmp.ne.s32.totalorder %s51, %s54
      %p60 = scmp.eq.s32.totalorder %s27, 0
      %p61 = por %p59, %p60
      %p62 = scmp.ne.s32.totalorder %s51, %s54
      %p63 = scmp.eq.s32.totalorder %s32, 1
      %p64 = por %p62, %p63
      %p65 = scmp.ne.s32.totalorder %s54, %s55
      %p66 = scmp.eq.s32.totalorder %s32, 0
      %p67 = por %p65, %p66
      %p68 = scmp.ne.s32.totalorder %s54, %s55
      %p69 = scmp.eq.s32.totalorder %s33, 1
      %p70 = por %p68, %p69
      %p72 = scmp.ne.s32.totalorder %s55, %s71
      %p73 = scmp.eq.s32.totalorder %s33, 0
      %p74 = por %p72, %p73
      %s76 = sadd.s32 %s75, 1
      %p79 = scmp.eq.s32.totalorder %s27, 1
      %p80 = scmp.ne.s32.totalorder %s75, %s77
      %p81 = scmp.eq.s32.totalorder %s27, 0
      %p82 = por %p80, %p81
      %p83 = scmp.ne.s32.totalorder %s75, %s77
      %p84 = scmp.eq.s32.totalorder %s32, 1
      %p85 = por %p83, %p84
      %p86 = scmp.ne.s32.totalorder %s77, %s78
      %p87 = scmp.eq.s32.totalorder %s32, 0
      %p88 = por %p86, %p87
      %p89 = scmp.ne.s32.totalorder %s77, %s78
      %p90 = scmp.eq.s32.totalorder %s33, 1
      %p91 = por %p89, %p90
      %p93 = scmp.ne.s32.totalorder %s78, %s92
      %p94 = scmp.eq.s32.totalorder %s33, 0
      %p95 = por %p93, %p94
      %s97 = sadd.s32 %s96, 1
      %p100 = scmp.eq.s32.totalorder %s27, 1
      %p101 = scmp.ne.s32.totalorder %s96, %s98
      %p102 = scmp.eq.s32.totalorder %s27, 0
      %p103 = por %p101, %p102
      %p104 = scmp.ne.s32.totalorder %s96, %s98
      %p105 = scmp.eq.s32.totalorder %s32, 1
      %p106 = por %p104, %p105
      %p107 = scmp.ne.s32.totalorder %s98, %s99
      %p108 = scmp.eq.s32.totalorder %s32, 0
      %p109 = por %p107, %p108
      %p110 = scmp.ne.s32.totalorder %s98, %s99
      %p111 = scmp.eq.s32.totalorder %s33, 1
      %p112 = por %p110, %p111
      %p114 = scmp.ne.s32.totalorder %s99, %s113
      %p115 = scmp.eq.s32.totalorder %s33, 0
      %p116 = por %p114, %p115
      %s118 = sadd.s32 %s117, 1
      %p121 = scmp.eq.s32.totalorder %s27, 1
      %p122 = scmp.ne.s32.totalorder %s117, %s119
      %p123 = scmp.eq.s32.totalorder %s27, 0
      %p124 = por %p122, %p123
      %p125 = scmp.ne.s32.totalorder %s117, %s119
      %p126 = scmp.eq.s32.totalorder %s32, 1
      %p127 = por %p125, %p126
      %p128 = scmp.ne.s32.totalorder %s119, %s120
      %p129 = scmp.eq.s32.totalorder %s32, 0
      %p130 = por %p128, %p129
      %p131 = scmp.ne.s32.totalorder %s119, %s120
      %p132 = scmp.eq.s32.totalorder %s33, 1
      %p133 = por %p131, %p132
      %p135 = scmp.ne.s32.totalorder %s120, %s134
      %p136 = scmp.eq.s32.totalorder %s33, 0
      %p137 = por %p135, %p136
      %s139 = sadd.s32 %s138, 1
      %p142 = scmp.eq.s32.totalorder %s27, 1
      %p143 = scmp.ne.s32.totalorder %s138, %s140
      %p144 = scmp.eq.s32.totalorder %s27, 0
      %p145 = por %p143, %p144
      %p146 = scmp.ne.s32.totalorder %s138, %s140
      %p147 = scmp.eq.s32.totalorder %s32, 1
      %p148 = por %p146, %p147
      %p149 = scmp.ne.s32.totalorder %s140, %s141
      %p150 = scmp.eq.s32.totalorder %s32, 0
      %p151 = por %p149, %p150
      %p152 = scmp.ne.s32.totalorder %s140, %s141
      %p153 = scmp.eq.s32.totalorder %s33, 1
      %p154 = por %p152, %p153
      %p156 = scmp.ne.s32.totalorder %s141, %s155
      %p157 = scmp.eq.s32.totalorder %s33, 0
      %p158 = por %p156, %p157
      %s160 = sadd.s32 %s159, 1
      %p163 = scmp.eq.s32.totalorder %s27, 1
      %p164 = scmp.ne.s32.totalorder %s159, %s161
      %p165 = scmp.eq.s32.totalorder %s27, 0
      %p166 = por %p164, %p165
      %p167 = scmp.ne.s32.totalorder %s159, %s161
      %p168 = scmp.eq.s32.totalorder %s32, 1
      %p169 = por %p167, %p168
      %p170 = scmp.ne.s32.totalorder %s161, %s162
      %p171 = scmp.eq.s32.totalorder %s32, 0
      %p172 = por %p170, %p171
      %p173 = scmp.ne.s32.totalorder %s161, %s162
      %p174 = scmp.eq.s32.totalorder %s33, 1
      %p175 = por %p173, %p174
      %p177 = scmp.ne.s32.totalorder %s162, %s176
      %p178 = scmp.eq.s32.totalorder %s33, 0
      %p179 = por %p177, %p178
      %s181 = sadd.s32 %s180, 1
      %p184 = scmp.eq.s32.totalorder %s27, 1
      %p185 = scmp.ne.s32.totalorder %s180, %s182
      %p186 = scmp.eq.s32.totalorder %s27, 0
      %p187 = por %p185, %p186
      %p188 = scmp.ne.s32.totalorder %s180, %s182
      %p189 = scmp.eq.s32.totalorder %s32, 1
      %p190 = por %p188, %p189
      %p191 = scmp.ne.s32.totalorder %s182, %s183
      %p192 = scmp.eq.s32.totalorder %s32, 0
      %p193 = por %p191, %p192
      %p194 = scmp.ne.s32.totalorder %s182, %s183
      %p195 = scmp.eq.s32.totalorder %s33, 1
      %p196 = por %p194, %p195
      %p198 = scmp.ne.s32.totalorder %s183, %s197
      %p199 = scmp.eq.s32.totalorder %s33, 0
      %p200 = por %p198, %p199
      %s201 = ssub.s32 %s34, %s46
      %s202 = ssub.s32 %s35, %s42
      %s203 = sor.u32 %s201, %s202
      %p204 = scmp.eq.s32.totalorder %s203, 0
      %s206 = sadd.s32 %s205, 1
      %s207 = scalar_select %p204, %s205, %s206
      %p210 = pneg %p204
      %p211 = scmp.eq.s32.totalorder %s27, 1
      %p212 = por %p210, %p211
      %p213 = scmp.ne.s32.totalorder %s205, %s208
      %p214 = scmp.eq.s32.totalorder %s27, 0
      %p215 = por %p213, %p214
      %p216 = scmp.ne.s32.totalorder %s205, %s208
      %p217 = scmp.eq.s32.totalorder %s32, 1
      %p218 = por %p216, %p217
      %p219 = scmp.ne.s32.totalorder %s208, %s209
      %p220 = scmp.eq.s32.totalorder %s32, 0
      %p221 = por %p219, %p220
      %p222 = scmp.ne.s32.totalorder %s208, %s209
      %p223 = scmp.eq.s32.totalorder %s33, 1
      %p224 = por %p222, %p223
      %p226 = scmp.ne.s32.totalorder %s209, %s225
      %p227 = scmp.eq.s32.totalorder %s33, 0
      %p228 = por %p226, %p227
      %s229 = ssub.s32 %s34, %s46
      %s230 = ssub.s32 %s35, %s42
      %s231 = sor.u32 %s229, %s230
      %p232 = scmp.eq.s32.totalorder %s231, 0
      %s234 = sadd.s32 %s233, 1
      %s235 = scalar_select %p232, %s233, %s234
      %p238 = pneg %p232
      %p239 = scmp.eq.s32.totalorder %s27, 1
      %p240 = por %p238, %p239
      %p241 = scmp.ne.s32.totalorder %s233, %s236
      %p242 = scmp.eq.s32.totalorder %s27, 0
      %p243 = por %p241, %p242
      %p244 = scmp.ne.s32.totalorder %s233, %s236
      %p245 = scmp.eq.s32.totalorder %s32, 1
      %p246 = por %p244, %p245
      %p247 = scmp.ne.s32.totalorder %s236, %s237
      %p248 = scmp.eq.s32.totalorder %s32, 0
      %p249 = por %p247, %p248
      %p250 = scmp.ne.s32.totalorder %s236, %s237
      %p251 = scmp.eq.s32.totalorder %s33, 1
      %p252 = por %p250, %p251
      %p254 = scmp.ne.s32.totalorder %s237, %s253
      %p255 = scmp.eq.s32.totalorder %s33, 0
      %p256 = por %p254, %p255
      %s257 = ssub.s32 %s34, %s46
      %s258 = ssub.s32 %s35, %s42
      %s259 = sor.u32 %s257, %s258
      %p260 = scmp.eq.s32.totalorder %s259, 0
      %s262 = sadd.s32 %s261, 1
      %s263 = scalar_select %p260, %s261, %s262
      %p266 = pneg %p260
      %p267 = scmp.eq.s32.totalorder %s27, 1
      %p268 = por %p266, %p267
      %p269 = scmp.ne.s32.totalorder %s261, %s264
      %p270 = scmp.eq.s32.totalorder %s27, 0
      %p271 = por %p269, %p270
      %p272 = scmp.ne.s32.totalorder %s261, %s264
      %p273 = scmp.eq.s32.totalorder %s32, 1
      %p274 = por %p272, %p273
      %p275 = scmp.ne.s32.totalorder %s264, %s265
      %p276 = scmp.eq.s32.totalorder %s32, 0
      %p277 = por %p275, %p276
      %p278 = scmp.ne.s32.totalorder %s264, %s265
      %p279 = scmp.eq.s32.totalorder %s33, 1
      %p280 = por %p278, %p279
      %p282 = scmp.ne.s32.totalorder %s265, %s281
      %p283 = scmp.eq.s32.totalorder %s33, 0
      %p284 = por %p282, %p283
      %p285 = scmp.le.s32.totalorder 1, %s27
      %p286 = scmp.lt.s32.totalorder %s27, 3
      %p287 = pnand %p285, %p286
      %p288 = pneg %p287
      // Predicated region
      $region9: #{tpu_custom_call.1} parent=5 // pred_check
        _
      $region10: #{tpu_custom_call.1} parent=5 // pred_check_branch
        %290 = sbr.rel (%p287) target = $region12
      $region11: #{tpu_custom_call.1} parent=5 // pred_region
        %s291 = ssub.s32 %s27, 1
        // Predicated region
        $region13: #{tpu_custom_call.1} parent=11 // pred_check
          %p292 = pneg %p88
        $region14: #{tpu_custom_call.1} parent=11 // pred_check_branch
          %294 = sbr.rel (%p292) target = $region16
        $region15: #{tpu_custom_call.1} parent=11 // pred_region
          %s296 = ssub.s32 2048, 2048
          %297 = vsyncadd [#allocation6], %s296
          %s298 = sshll.u32 [#allocation5], 4
          %s299 = int_to_ptr.vmem [resolvable:$true] %s298
          %304 = dma.hbm_to_vmem [thread:$0]  %s1, 2048, %s299, [#allocation6], 128, 128, 8
        $region16: #{tpu_custom_call.1} parent=11 // pred_fallthru
          _
        // Predicated region
        $region17: #{tpu_custom_call.1} parent=11 // pred_check
          %p305 = pneg %p109
        $region18: #{tpu_custom_call.1} parent=11 // pred_check_branch
          %307 = sbr.rel (%p305) target = $region20
        $region19: #{tpu_custom_call.1} parent=11 // pred_region
          %s309 = ssub.s32 2048, 2048
          %310 = vsyncadd [#allocation6], %s309
          %s311 = sshll.u32 [#allocation7], 4
          %s312 = int_to_ptr.vmem [resolvable:$true] %s311
          %317 = dma.hbm_to_vmem [thread:$0]  %s2, 2048, %s312, [#allocation6], 128, 128, 8
        $region20: #{tpu_custom_call.1} parent=11 // pred_fallthru
          _
        // Predicated region
        $region21: #{tpu_custom_call.1} parent=11 // pred_check
          %p318 = pneg %p130
        $region22: #{tpu_custom_call.1} parent=11 // pred_check_branch
          %320 = sbr.rel (%p318) target = $region24
        $region23: #{tpu_custom_call.1} parent=11 // pred_region
          %s322 = ssub.s32 2048, 2048
          %323 = vsyncadd [#allocation9], %s322
          %s324 = sshll.u32 [#allocation8], 4
          %s325 = int_to_ptr.vmem [resolvable:$true] %s324
          %330 = dma.hbm_to_vmem [thread:$0]  %s3, 2048, %s325, [#allocation9], 128, 128, 8
        $region24: #{tpu_custom_call.1} parent=11 // pred_fallthru
          _
        // Predicated region
        $region25: #{tpu_custom_call.1} parent=11 // pred_check
          %p331 = pneg %p151
        $region26: #{tpu_custom_call.1} parent=11 // pred_check_branch
          %333 = sbr.rel (%p331) target = $region28
        $region27: #{tpu_custom_call.1} parent=11 // pred_region
          _
        $region28: #{tpu_custom_call.1} parent=11 // pred_fallthru
          _
        // Predicated region
        $region29: #{tpu_custom_call.1} parent=11 // pred_check
          %p334 = pneg %p172
        $region30: #{tpu_custom_call.1} parent=11 // pred_check_branch
          %336 = sbr.rel (%p334) target = $region32
        $region31: #{tpu_custom_call.1} parent=11 // pred_region
          _
        $region32: #{tpu_custom_call.1} parent=11 // pred_fallthru
          _
        // Predicated region
        $region33: #{tpu_custom_call.1} parent=11 // pred_check
          %p337 = pneg %p193
        $region34: #{tpu_custom_call.1} parent=11 // pred_check_branch
          %339 = sbr.rel (%p337) target = $region36
        $region35: #{tpu_custom_call.1} parent=11 // pred_region
          _
        $region36: #{tpu_custom_call.1} parent=11 // pred_fallthru
          _
      $region12: #{tpu_custom_call.1} parent=5 // pred_fallthru
        _
      %p340 = scmp.lt.s32.totalorder %s27, 2
      // Predicated region
      $region37: #{tpu_custom_call.1} parent=5 // pred_check
        %p341 = pneg %p340
      $region38: #{tpu_custom_call.1} parent=5 // pred_check_branch
        %343 = sbr.rel (%p341) target = $region40
      $region39: #{tpu_custom_call.1} parent=5 // pred_region
        // Predicated region
        $region41: #{tpu_custom_call.1} parent=39 // pred_check
          %p344 = pneg %p61
        $region42: #{tpu_custom_call.1} parent=39 // pred_check_branch
          %346 = sbr.rel (%p344) target = $region44
        $region43: #{tpu_custom_call.1} parent=39 // pred_region
          %s347 = sand.u32 %s51, 1
          %s348 = scalar_lea.sflag [#allocation3], %s347
          %s349 = sand.u32 %s51, 1
          %s350 = smul.addr %s349, 8
          %s351 = scalar_lea.vmem [#allocation2], %s350
          %s353 = ssub.s32 128, 128
          %354 = vsyncadd %s348, %s353
          %s355 = sadd.s32 %s35, %s34
          %s356 = smul.addr %s355, 128
          %s357 = scalar_lea.hbm %s0, %s356
          %s359 = sshll.u32 %s351, 4
          %s360 = int_to_ptr.vmem [resolvable:$true] %s359
          %362 = dma.hbm_to_vmem [thread:$0]  %s357, 128, %s360, %s348
        $region44: #{tpu_custom_call.1} parent=39 // pred_fallthru
          _
      $region40: #{tpu_custom_call.1} parent=5 // pred_fallthru
        _
      %p363 = scmp.le.s32.totalorder 1, %s27
      %p364 = scmp.lt.s32.totalorder %s27, 3
      %p365 = pnand %p363, %p364
      %p366 = pneg %p365
      // Predicated region
      $region45: #{tpu_custom_call.1} parent=5 // pred_check
        _
      $region46: #{tpu_custom_call.1} parent=5 // pred_check_branch
        %368 = sbr.rel (%p365) target = $region48
      $region47: #{tpu_custom_call.1} parent=5 // pred_region
        %s369 = ssub.s32 %s27, 1
        %s370 = sand.u32 %s54, 1
        %s371 = scalar_lea.sflag [#allocation3], %s370
        %s372 = sand.u32 %s54, 1
        %s373 = smul.addr %s372, 8
        %s374 = scalar_lea.vmem [#allocation2], %s373
        // Predicated region
        $region49: #{tpu_custom_call.1} parent=47 // pred_check
          %p375 = pneg %p67
        $region50: #{tpu_custom_call.1} parent=47 // pred_check_branch
          %377 = sbr.rel (%p375) target = $region52
        $region51: #{tpu_custom_call.1} parent=47 // pred_region
          %378 = dma.done %s371, 128
        $region52: #{tpu_custom_call.1} parent=47 // pred_fallthru
          _
        // Predicated region
        $region53: #{tpu_custom_call.1} parent=47 // pred_check
          %p379 = pneg %p88
        $region54: #{tpu_custom_call.1} parent=47 // pred_check_branch
          %381 = sbr.rel (%p379) target = $region56
        $region55: #{tpu_custom_call.1} parent=47 // pred_region
          %382 = dma.done [#allocation6], 2048
        $region56: #{tpu_custom_call.1} parent=47 // pred_fallthru
          _
        // Predicated region
        $region57: #{tpu_custom_call.1} parent=47 // pred_check
          %p383 = pneg %p109
        $region58: #{tpu_custom_call.1} parent=47 // pred_check_branch
          %385 = sbr.rel (%p383) target = $region60
        $region59: #{tpu_custom_call.1} parent=47 // pred_region
          %386 = dma.done [#allocation6], 2048
        $region60: #{tpu_custom_call.1} parent=47 // pred_fallthru
          _
        // Predicated region
        $region61: #{tpu_custom_call.1} parent=47 // pred_check
          %p387 = pneg %p130
        $region62: #{tpu_custom_call.1} parent=47 // pred_check_branch
          %389 = sbr.rel (%p387) target = $region64
        $region63: #{tpu_custom_call.1} parent=47 // pred_region
          %390 = dma.done [#allocation9], 2048
        $region64: #{tpu_custom_call.1} parent=47 // pred_fallthru
          _
        %s391 = sand.u32 %s54, 1
        %s392 = scalar_lea.sflag [#allocation3], %s391
        %s393 = sand.u32 %s54, 1
        %s394 = smul.addr %s393, 8
        %s395 = scalar_lea.vmem [#allocation2], %s394
        %p396 = pneg %p67
        %p397 = pneg %p64
        %p398 = pneg %p88
        %p399 = pneg %p85
        %p400 = pneg %p109
        %p401 = pneg %p106
        %p402 = pneg %p130
        %p403 = pneg %p127
        %p404 = pneg %p151
        %p405 = pneg %p148
        %p406 = pneg %p172
        %p407 = pneg %p169
        %p408 = pneg %p193
        %p409 = pneg %p190
        %p410 = pneg %p221
        %p411 = pneg %p218
        %s412 = sand.u32 %s208, 1
        %s413 = scalar_lea.sflag [#allocation4], %s412
        %s414 = sand.u32 %s208, 1
        %s415 = smul.addr %s414, 4
        %s416 = scalar_lea.vmem [#allocation10], %s415
        %p417 = pneg %p249
        %p418 = pneg %p246
        %p419 = scmp.lt.s32.totalorder %s36, 1
        %s420 = scalar_select %p419, %s36, 1
        %p421 = scmp.lt.s32.totalorder %s37, 0
        %s422 = scalar_select %p421, %s37, 0
        %s423 = smul.addr %s420, 16
        %s424 = sadd.s32 %s422, %s423
        %s425 = smul.addr %s424, 4
        %s426 = scalar_lea.vmem %s8, %s425
        %p427 = pneg %p277
        %p428 = pneg %p274
        %s429 = sand.u32 %s264, 1
        %s430 = scalar_lea.sflag [#allocation12], %s429
        %s431 = sand.u32 %s264, 1
        %s432 = smul.addr %s431, 4
        %s433 = scalar_lea.vmem [#allocation11], %s432
        %p434 = scmp.lt.s32.totalorder %s36, 1
        %s435 = scalar_select %p434, %s36, 1
        %p436 = scmp.lt.s32.totalorder %s37, 0
        %s437 = scalar_select %p436, %s37, 0
        %s438 = smul.addr %s435, 16
        %s439 = sadd.s32 %s437, %s438
        %s440 = smul.addr %s439, 4
        %s441 = scalar_lea.vmem %s8, %s440
        %v442 = vld [vmem:[%s374] sm:$0xff]
        %v443 = vld [vmem:[#allocation5] sm:$0xff]
        %v444 = vld [vmem:[#allocation5 + $0x8] sm:$0xff]
        %v445 = vld [vmem:[#allocation5 + $0x10] sm:$0xff]
        %v446 = vld [vmem:[#allocation5 + $0x18] sm:$0xff]
        %v447 = vld [vmem:[#allocation5 + $0x20] sm:$0xff]
        %v448 = vld [vmem:[#allocation5 + $0x28] sm:$0xff]
        %v449 = vld [vmem:[#allocation5 + $0x30] sm:$0xff]
        %v450 = vld [vmem:[#allocation5 + $0x38] sm:$0xff]
        %v451 = vld [vmem:[#allocation5 + $0x40] sm:$0xff]
        %v452 = vld [vmem:[#allocation5 + $0x48] sm:$0xff]
        %v453 = vld [vmem:[#allocation5 + $0x50] sm:$0xff]
        %v454 = vld [vmem:[#allocation5 + $0x58] sm:$0xff]
        %v455 = vld [vmem:[#allocation5 + $0x60] sm:$0xff]
        %v456 = vld [vmem:[#allocation5 + $0x68] sm:$0xff]
        %v457 = vld [vmem:[#allocation5 + $0x70] sm:$0xff]
        %v458 = vld [vmem:[#allocation5 + $0x78] sm:$0xff]
        %v459 = vld [vmem:[%s4] sm:$0x1]
        %v461 = vlaneseq
        %v462 = vshrl.u32 %v461, 7
        %v463 = vsub.s32 0, %v462
        %v464 = vrot.slane %v459, %v463
        %466 = vmatprep.subr.mxu0 0.0
        %467 = vmatpush1.msra.mxu0 %v443
        %468 = vmatprep.subr.mxu0 0.0
        %469 = vmatpush1.msra.mxu0 %v444
        %470 = vmatprep.subr.mxu0 0.0
        %471 = vmatpush1.msra.mxu0 %v445
        %472 = vmatprep.subr.mxu0 0.0
        %473 = vmatpush1.msra.mxu0 %v446
        %474 = vmatprep.subr.mxu0 0.0
        %475 = vmatpush1.msra.mxu0 %v447
        %476 = vmatprep.subr.mxu0 0.0
        %477 = vmatpush1.msra.mxu0 %v448
        %478 = vmatprep.subr.mxu0 0.0
        %479 = vmatpush1.msra.mxu0 %v449
        %480 = vmatprep.subr.mxu0 0.0
        %481 = vmatpush1.msra.mxu0 %v450
        %482 = vmatprep.subr.mxu0 0.0
        %483 = vmatpush1.msra.mxu0 %v451
        %484 = vmatprep.subr.mxu0 0.0
        %485 = vmatpush1.msra.mxu0 %v452
        %486 = vmatprep.subr.mxu0 0.0
        %487 = vmatpush1.msra.mxu0 %v453
        %488 = vmatprep.subr.mxu0 0.0
        %489 = vmatpush1.msra.mxu0 %v454
        %490 = vmatprep.subr.mxu0 0.0
        %491 = vmatpush1.msra.mxu0 %v455
        %492 = vmatprep.subr.mxu0 0.0
        %493 = vmatpush1.msra.mxu0 %v456
        %494 = vmatprep.subr.mxu0 0.0
        %495 = vmatpush1.msra.mxu0 %v457
        %496 = vmatprep.subr.mxu0 0.0
        %497 = vmatpush1.msra.mxu0 %v458
        %498 = vmatprep.subr.mxu0 0.0
        %499 = vmatpush1.msra.mxu0 0.0
        %500 = vmatprep.subr.mxu0 0.0
        %501 = vmatpush1.msra.mxu0 0.0
        %502 = vmatprep.subr.mxu0 0.0
        %503 = vmatpush1.msra.mxu0 0.0
        %504 = vmatprep.subr.mxu0 0.0
        %505 = vmatpush1.msra.mxu0 0.0
        %506 = vmatprep.subr.mxu0 0.0
        %507 = vmatpush1.msra.mxu0 0.0
        %508 = vmatprep.subr.mxu0 0.0
        %509 = vmatpush1.msra.mxu0 0.0
        %510 = vmatprep.subr.mxu0 0.0
        %511 = vmatpush1.msra.mxu0 0.0
        %512 = vmatprep.subr.mxu0 0.0
        %513 = vmatpush1.msra.mxu0 0.0
        %514 = vmatprep.subr.mxu0 0.0
        %515 = vmatpush1.msra.mxu0 0.0
        %516 = vmatprep.subr.mxu0 0.0
        %517 = vmatpush1.msra.mxu0 0.0
        %518 = vmatprep.subr.mxu0 0.0
        %519 = vmatpush1.msra.mxu0 0.0
        %520 = vmatprep.subr.mxu0 0.0
        %521 = vmatpush1.msra.mxu0 0.0
        %522 = vmatprep.subr.mxu0 0.0
        %523 = vmatpush1.msra.mxu0 0.0
        %524 = vmatprep.subr.mxu0 0.0
        %525 = vmatpush1.msra.mxu0 0.0
        %526 = vmatprep.subr.mxu0 0.0
        %527 = vmatpush1.msra.mxu0 0.0
        %528 = vmatprep.subr.mxu0 0.0
        %529 = vmatpush1.msra.mxu0 0.0
        %530 = vmatprep.mubr.f32.mxu0 0.0
        %531 = vmatmul.mubr.f32.gmra.mrb[0].mxu0 %v442
        %v532 = vpop.f32.mrb[0].mxu0
        %v533 = vadd.f32 %v464, %v532
        %v534 = vpop.f32.mrb[0].mxu0
        %535 = vdwg.mxu0
        %v536 = vmul.f32 %v533, 0.17677669
        %v537 = vpack.c.bf16 %v536, %v536
        %538 = vst [vmem:[%s416] sm:$0xf] %v537
        %v539 = vld [vmem:[#allocation7] sm:$0xff]
        %v540 = vld [vmem:[#allocation7 + $0x8] sm:$0xff]
        %v541 = vld [vmem:[#allocation7 + $0x10] sm:$0xff]
        %v542 = vld [vmem:[#allocation7 + $0x18] sm:$0xff]
        %v543 = vld [vmem:[#allocation7 + $0x20] sm:$0xff]
        %v544 = vld [vmem:[#allocation7 + $0x28] sm:$0xff]
        %v545 = vld [vmem:[#allocation7 + $0x30] sm:$0xff]
        %v546 = vld [vmem:[#allocation7 + $0x38] sm:$0xff]
        %v547 = vld [vmem:[#allocation7 + $0x40] sm:$0xff]
        %v548 = vld [vmem:[#allocation7 + $0x48] sm:$0xff]
        %v549 = vld [vmem:[#allocation7 + $0x50] sm:$0xff]
        %v550 = vld [vmem:[#allocation7 + $0x58] sm:$0xff]
        %v551 = vld [vmem:[#allocation7 + $0x60] sm:$0xff]
        %v552 = vld [vmem:[#allocation7 + $0x68] sm:$0xff]
        %v553 = vld [vmem:[#allocation7 + $0x70] sm:$0xff]
        %v554 = vld [vmem:[#allocation7 + $0x78] sm:$0xff]
        %v555 = vld [vmem:[%s5] sm:$0x1]
        %v557 = vlaneseq
        %v558 = vshrl.u32 %v557, 7
        %v559 = vsub.s32 0, %v558
        %v560 = vrot.slane %v555, %v559
        %562 = vmatprep.subr.mxu0 0.0
        %563 = vmatpush1.msra.mxu0 %v539
        %564 = vmatprep.subr.mxu0 0.0
        %565 = vmatpush1.msra.mxu0 %v540
        %566 = vmatprep.subr.mxu0 0.0
        %567 = vmatpush1.msra.mxu0 %v541
        %568 = vmatprep.subr.mxu0 0.0
        %569 = vmatpush1.msra.mxu0 %v542
        %570 = vmatprep.subr.mxu0 0.0
        %571 = vmatpush1.msra.mxu0 %v543
        %572 = vmatprep.subr.mxu0 0.0
        %573 = vmatpush1.msra.mxu0 %v544
        %574 = vmatprep.subr.mxu0 0.0
        %575 = vmatpush1.msra.mxu0 %v545
        %576 = vmatprep.subr.mxu0 0.0
        %577 = vmatpush1.msra.mxu0 %v546
        %578 = vmatprep.subr.mxu0 0.0
        %579 = vmatpush1.msra.mxu0 %v547
        %580 = vmatprep.subr.mxu0 0.0
        %581 = vmatpush1.msra.mxu0 %v548
        %582 = vmatprep.subr.mxu0 0.0
        %583 = vmatpush1.msra.mxu0 %v549
        %584 = vmatprep.subr.mxu0 0.0
        %585 = vmatpush1.msra.mxu0 %v550
        %586 = vmatprep.subr.mxu0 0.0
        %587 = vmatpush1.msra.mxu0 %v551
        %588 = vmatprep.subr.mxu0 0.0
        %589 = vmatpush1.msra.mxu0 %v552
        %590 = vmatprep.subr.mxu0 0.0
        %591 = vmatpush1.msra.mxu0 %v553
        %592 = vmatprep.subr.mxu0 0.0
        %593 = vmatpush1.msra.mxu0 %v554
        %594 = vmatprep.subr.mxu0 0.0
        %595 = vmatpush1.msra.mxu0 0.0
        %596 = vmatprep.subr.mxu0 0.0
        %597 = vmatpush1.msra.mxu0 0.0
        %598 = vmatprep.subr.mxu0 0.0
        %599 = vmatpush1.msra.mxu0 0.0
        %600 = vmatprep.subr.mxu0 0.0
        %601 = vmatpush1.msra.mxu0 0.0
        %602 = vmatprep.subr.mxu0 0.0
        %603 = vmatpush1.msra.mxu0 0.0
        %604 = vmatprep.subr.mxu0 0.0
        %605 = vmatpush1.msra.mxu0 0.0
        %606 = vmatprep.subr.mxu0 0.0
        %607 = vmatpush1.msra.mxu0 0.0
        %608 = vmatprep.subr.mxu0 0.0
        %609 = vmatpush1.msra.mxu0 0.0
        %610 = vmatprep.subr.mxu0 0.0
        %611 = vmatpush1.msra.mxu0 0.0
        %612 = vmatprep.subr.mxu0 0.0
        %613 = vmatpush1.msra.mxu0 0.0
        %614 = vmatprep.subr.mxu0 0.0
        %615 = vmatpush1.msra.mxu0 0.0
        %616 = vmatprep.subr.mxu0 0.0
        %617 = vmatpush1.msra.mxu0 0.0
        %618 = vmatprep.subr.mxu0 0.0
        %619 = vmatpush1.msra.mxu0 0.0
        %620 = vmatprep.subr.mxu0 0.0
        %621 = vmatpush1.msra.mxu0 0.0
        %622 = vmatprep.subr.mxu0 0.0
        %623 = vmatpush1.msra.mxu0 0.0
        %624 = vmatprep.subr.mxu0 0.0
        %625 = vmatpush1.msra.mxu0 0.0
        %626 = vmatprep.mubr.f32.mxu0 0.0
        %627 = vmatmul.mubr.f32.gmra.mrb[0].mxu0 %v442
        %v628 = vpop.f32.mrb[0].mxu0
        %v629 = vadd.f32 %v560, %v628
        %v630 = vpop.f32.mrb[0].mxu0
        %631 = vdwg.mxu0
        %632 = vxpose.xlu0.b32.start [1/16] %v629, 128
        %633 = vxpose.xlu0.b32.cont [2/16] 0.0, 128
        %634 = vxpose.xlu0.b32.cont [3/16] 0.0, 128
        %635 = vxpose.xlu0.b32.cont [4/16] 0.0, 128
        %636 = vxpose.xlu0.b32.cont [5/16] 0.0, 128
        %637 = vxpose.xlu0.b32.cont [6/16] 0.0, 128
        %638 = vxpose.xlu0.b32.cont [7/16] 0.0, 128
        %639 = vxpose.xlu0.b32.cont [8/16] 0.0, 128
        %640 = vxpose.xlu0.b32.cont [9/16] 0.0, 128
        %641 = vxpose.xlu0.b32.cont [10/16] 0.0, 128
        %642 = vxpose.xlu0.b32.cont [11/16] 0.0, 128
        %643 = vxpose.xlu0.b32.cont [12/16] 0.0, 128
        %644 = vxpose.xlu0.b32.cont [13/16] 0.0, 128
        %645 = vxpose.xlu0.b32.cont [14/16] 0.0, 128
        %646 = vxpose.xlu0.b32.cont [15/16] 0.0, 128
        %647 = vxpose.xlu0.b32.end [16/16] 0.0, 128
        %v648 = vpop.trf.xlu0
        %v649 = vpop.trf.xlu0
        %v650 = vpop.trf.xlu0
        %v651 = vpop.trf.xlu0
        %v652 = vpop.trf.xlu0
        %v653 = vpop.trf.xlu0
        %v654 = vpop.trf.xlu0
        %v655 = vpop.trf.xlu0
        %v656 = vpop.trf.xlu0
        %v657 = vpop.trf.xlu0
        %v658 = vpop.trf.xlu0
        %v659 = vpop.trf.xlu0
        %v660 = vpop.trf.xlu0
        %v661 = vpop.trf.xlu0
        %v662 = vpop.trf.xlu0
        %v663 = vpop.trf.xlu0
        %v664 = vpack.c.bf16 %v649, %v648
        %v665 = vpack.c.bf16 %v651, %v650
        %v666 = vpack.c.bf16 %v653, %v652
        %v667 = vpack.c.bf16 %v655, %v654
        %v668 = vpack.c.bf16 %v657, %v656
        %v669 = vpack.c.bf16 %v659, %v658
        %v670 = vpack.c.bf16 %v661, %v660
        %v671 = vpack.c.bf16 %v663, %v662
        %v680 = vunpack.c.l.b16 %v664
        %v681 = vunpack.c.h.b16 %v664
        %v682 = vunpack.c.l.b16 %v665
        %v683 = vunpack.c.h.b16 %v665
        %v684 = vunpack.c.l.b16 %v666
        %v685 = vunpack.c.h.b16 %v666
        %v686 = vunpack.c.l.b16 %v667
        %v687 = vunpack.c.h.b16 %v667
        %v688 = vunpack.c.l.b16 %v668
        %v689 = vunpack.c.h.b16 %v668
        %v690 = vunpack.c.l.b16 %v669
        %v691 = vunpack.c.h.b16 %v669
        %v692 = vunpack.c.l.b16 %v670
        %v693 = vunpack.c.h.b16 %v670
        %v694 = vunpack.c.l.b16 %v671
        %v695 = vunpack.c.h.b16 %v671
        %v696 = vpack.c.b16 %v680, %v680
        %v697 = vpack.c.b16 %v681, %v681
        %v698 = vpack.c.b16 %v682, %v682
        %v699 = vpack.c.b16 %v683, %v683
        %v700 = vpack.c.b16 %v684, %v684
        %v701 = vpack.c.b16 %v685, %v685
        %v702 = vpack.c.b16 %v686, %v686
        %v703 = vpack.c.b16 %v687, %v687
        %v704 = vpack.c.b16 %v688, %v688
        %v705 = vpack.c.b16 %v689, %v689
        %v706 = vpack.c.b16 %v690, %v690
        %v707 = vpack.c.b16 %v691, %v691
        %v708 = vpack.c.b16 %v692, %v692
        %v709 = vpack.c.b16 %v693, %v693
        %v710 = vpack.c.b16 %v694, %v694
        %v711 = vpack.c.b16 %v695, %v695
        %vm728 = vcmask 60416
        %729 = vst.msk [vmem:[%s441] sm:$0xf] %vm728, %v696
        %730 = vst.msk [vmem:[%s441 + $0x4] sm:$0xf] %vm728, %v697
        %731 = vst.msk [vmem:[%s441 + $0x8] sm:$0xf] %vm728, %v698
        %732 = vst.msk [vmem:[%s441 + $0xc] sm:$0xf] %vm728, %v699
        %733 = vst.msk [vmem:[%s441 + $0x10] sm:$0xf] %vm728, %v700
        %734 = vst.msk [vmem:[%s441 + $0x14] sm:$0xf] %vm728, %v701
        %735 = vst.msk [vmem:[%s441 + $0x18] sm:$0xf] %vm728, %v702
        %736 = vst.msk [vmem:[%s441 + $0x1c] sm:$0xf] %vm728, %v703
        %737 = vst.msk [vmem:[%s441 + $0x20] sm:$0xf] %vm728, %v704
        %738 = vst.msk [vmem:[%s441 + $0x24] sm:$0xf] %vm728, %v705
        %739 = vst.msk [vmem:[%s441 + $0x28] sm:$0xf] %vm728, %v706
        %740 = vst.msk [vmem:[%s441 + $0x2c] sm:$0xf] %vm728, %v707
        %741 = vst.msk [vmem:[%s441 + $0x30] sm:$0xf] %vm728, %v708
        %742 = vst.msk [vmem:[%s441 + $0x34] sm:$0xf] %vm728, %v709
        %743 = vst.msk [vmem:[%s441 + $0x38] sm:$0xf] %vm728, %v710
        %744 = vst.msk [vmem:[%s441 + $0x3c] sm:$0xf] %vm728, %v711
        %v745 = vld [vmem:[#allocation8] sm:$0xff]
        %v746 = vld [vmem:[#allocation8 + $0x8] sm:$0xff]
        %v747 = vld [vmem:[#allocation8 + $0x10] sm:$0xff]
        %v748 = vld [vmem:[#allocation8 + $0x18] sm:$0xff]
        %v749 = vld [vmem:[#allocation8 + $0x20] sm:$0xff]
        %v750 = vld [vmem:[#allocation8 + $0x28] sm:$0xff]
        %v751 = vld [vmem:[#allocation8 + $0x30] sm:$0xff]
        %v752 = vld [vmem:[#allocation8 + $0x38] sm:$0xff]
        %v753 = vld [vmem:[#allocation8 + $0x40] sm:$0xff]
        %v754 = vld [vmem:[#allocation8 + $0x48] sm:$0xff]
        %v755 = vld [vmem:[#allocation8 + $0x50] sm:$0xff]
        %v756 = vld [vmem:[#allocation8 + $0x58] sm:$0xff]
        %v757 = vld [vmem:[#allocation8 + $0x60] sm:$0xff]
        %v758 = vld [vmem:[#allocation8 + $0x68] sm:$0xff]
        %v759 = vld [vmem:[#allocation8 + $0x70] sm:$0xff]
        %v760 = vld [vmem:[#allocation8 + $0x78] sm:$0xff]
        %v761 = vld [vmem:[%s6] sm:$0x1]
        %v763 = vlaneseq
        %v764 = vshrl.u32 %v763, 7
        %v765 = vsub.s32 0, %v764
        %v766 = vrot.slane %v761, %v765
        %768 = vmatprep.subr.mxu0 0.0
        %769 = vmatpush1.msra.mxu0 %v745
        %770 = vmatprep.subr.mxu0 0.0
        %771 = vmatpush1.msra.mxu0 %v746
        %772 = vmatprep.subr.mxu0 0.0
        %773 = vmatpush1.msra.mxu0 %v747
        %774 = vmatprep.subr.mxu0 0.0
        %775 = vmatpush1.msra.mxu0 %v748
        %776 = vmatprep.subr.mxu0 0.0
        %777 = vmatpush1.msra.mxu0 %v749
        %778 = vmatprep.subr.mxu0 0.0
        %779 = vmatpush1.msra.mxu0 %v750
        %780 = vmatprep.subr.mxu0 0.0
        %781 = vmatpush1.msra.mxu0 %v751
        %782 = vmatprep.subr.mxu0 0.0
        %783 = vmatpush1.msra.mxu0 %v752
        %784 = vmatprep.subr.mxu0 0.0
        %785 = vmatpush1.msra.mxu0 %v753
        %786 = vmatprep.subr.mxu0 0.0
        %787 = vmatpush1.msra.mxu0 %v754
        %788 = vmatprep.subr.mxu0 0.0
        %789 = vmatpush1.msra.mxu0 %v755
        %790 = vmatprep.subr.mxu0 0.0
        %791 = vmatpush1.msra.mxu0 %v756
        %792 = vmatprep.subr.mxu0 0.0
        %793 = vmatpush1.msra.mxu0 %v757
        %794 = vmatprep.subr.mxu0 0.0
        %795 = vmatpush1.msra.mxu0 %v758
        %796 = vmatprep.subr.mxu0 0.0
        %797 = vmatpush1.msra.mxu0 %v759
        %798 = vmatprep.subr.mxu0 0.0
        %799 = vmatpush1.msra.mxu0 %v760
        %800 = vmatprep.subr.mxu0 0.0
        %801 = vmatpush1.msra.mxu0 0.0
        %802 = vmatprep.subr.mxu0 0.0
        %803 = vmatpush1.msra.mxu0 0.0
        %804 = vmatprep.subr.mxu0 0.0
        %805 = vmatpush1.msra.mxu0 0.0
        %806 = vmatprep.subr.mxu0 0.0
        %807 = vmatpush1.msra.mxu0 0.0
        %808 = vmatprep.subr.mxu0 0.0
        %809 = vmatpush1.msra.mxu0 0.0
        %810 = vmatprep.subr.mxu0 0.0
        %811 = vmatpush1.msra.mxu0 0.0
        %812 = vmatprep.subr.mxu0 0.0
        %813 = vmatpush1.msra.mxu0 0.0
        %814 = vmatprep.subr.mxu0 0.0
        %815 = vmatpush1.msra.mxu0 0.0
        %816 = vmatprep.subr.mxu0 0.0
        %817 = vmatpush1.msra.mxu0 0.0
        %818 = vmatprep.subr.mxu0 0.0
        %819 = vmatpush1.msra.mxu0 0.0
        %820 = vmatprep.subr.mxu0 0.0
        %821 = vmatpush1.msra.mxu0 0.0
        %822 = vmatprep.subr.mxu0 0.0
        %823 = vmatpush1.msra.mxu0 0.0
        %824 = vmatprep.subr.mxu0 0.0
        %825 = vmatpush1.msra.mxu0 0.0
        %826 = vmatprep.subr.mxu0 0.0
        %827 = vmatpush1.msra.mxu0 0.0
        %828 = vmatprep.subr.mxu0 0.0
        %829 = vmatpush1.msra.mxu0 0.0
        %830 = vmatprep.subr.mxu0 0.0
        %831 = vmatpush1.msra.mxu0 0.0
        %832 = vmatprep.mubr.f32.mxu0 0.0
        %833 = vmatmul.mubr.f32.gmra.mrb[0].mxu0 %v442
        %v834 = vpop.f32.mrb[0].mxu0
        %v835 = vadd.f32 %v766, %v834
        %v836 = vpop.f32.mrb[0].mxu0
        %837 = vdwg.mxu0
        %v838 = vpack.c.bf16 %v835, %v835
        %839 = vst [vmem:[%s433] sm:$0xf] %v838
        %s840 = sand.u32 %s208, 1
        %s841 = scalar_lea.sflag [#allocation4], %s840
        %s842 = sand.u32 %s208, 1
        %s843 = smul.addr %s842, 4
        %s844 = scalar_lea.vmem [#allocation10], %s843
        %p845 = scmp.lt.s32.totalorder %s36, 1
        %s846 = scalar_select %p845, %s36, 1
        %p847 = scmp.lt.s32.totalorder %s37, 0
        %s848 = scalar_select %p847, %s37, 0
        %s849 = smul.addr %s846, 16
        %s850 = sadd.s32 %s848, %s849
        %s851 = smul.addr %s850, 4
        %s852 = scalar_lea.vmem %s8, %s851
        %s853 = sand.u32 %s264, 1
        %s854 = scalar_lea.sflag [#allocation12], %s853
        %s855 = sand.u32 %s264, 1
        %s856 = smul.addr %s855, 4
        %s857 = scalar_lea.vmem [#allocation11], %s856
        // Predicated region
        $region65: #{tpu_custom_call.1} parent=47 // pred_check
          %p858 = pneg %p218
        $region66: #{tpu_custom_call.1} parent=47 // pred_check_branch
          %860 = sbr.rel (%p858) target = $region68
        $region67: #{tpu_custom_call.1} parent=47 // pred_region
          %s862 = ssub.s32 64, 64
          %863 = vsyncadd %s841, %s862
          %s864 = sadd.s32 %s37, %s36
          %s865 = smul.addr %s864, 64
          %s866 = scalar_lea.hbm %s7, %s865
          %s868 = sshll.u32 %s844, 4
          %s869 = int_to_ptr.vmem [resolvable:$true] %s868
          %871 = dma.vmem_to_hbm [thread:$0]  %s869, 64, %s866, %s841
        $region68: #{tpu_custom_call.1} parent=47 // pred_fallthru
          _
        // Predicated region
        $region69: #{tpu_custom_call.1} parent=47 // pred_check
          %p872 = pneg %p246
        $region70: #{tpu_custom_call.1} parent=47 // pred_check_branch
          %874 = sbr.rel (%p872) target = $region72
        $region71: #{tpu_custom_call.1} parent=47 // pred_region
          _
        $region72: #{tpu_custom_call.1} parent=47 // pred_fallthru
          _
        // Predicated region
        $region73: #{tpu_custom_call.1} parent=47 // pred_check
          %p875 = pneg %p274
        $region74: #{tpu_custom_call.1} parent=47 // pred_check_branch
          %877 = sbr.rel (%p875) target = $region76
        $region75: #{tpu_custom_call.1} parent=47 // pred_region
          %s879 = ssub.s32 64, 64
          %880 = vsyncadd %s854, %s879
          %s881 = sadd.s32 %s37, %s36
          %s882 = smul.addr %s881, 64
          %s883 = scalar_lea.hbm %s9, %s882
          %s885 = sshll.u32 %s857, 4
          %s886 = int_to_ptr.vmem [resolvable:$true] %s885
          %888 = dma.vmem_to_hbm [thread:$0]  %s886, 64, %s883, %s854
        $region76: #{tpu_custom_call.1} parent=47 // pred_fallthru
          _
      $region48: #{tpu_custom_call.1} parent=5 // pred_fallthru
        _
      %p889 = scmp.le.s32.totalorder 2, %s27
      // Predicated region
      $region77: #{tpu_custom_call.1} parent=5 // pred_check
        %p890 = pneg %p889
      $region78: #{tpu_custom_call.1} parent=5 // pred_check_branch
        %892 = sbr.rel (%p890) target = $region80
      $region79: #{tpu_custom_call.1} parent=5 // pred_region
        %s893 = ssub.s32 %s27, 2
        // Predicated region
        $region81: #{tpu_custom_call.1} parent=79 // pred_check
          %p894 = pneg %p224
        $region82: #{tpu_custom_call.1} parent=79 // pred_check_branch
          %896 = sbr.rel (%p894) target = $region84
        $region83: #{tpu_custom_call.1} parent=79 // pred_region
          %s897 = sand.u32 %s209, 1
          %s898 = scalar_lea.sflag [#allocation4], %s897
          %s899 = sand.u32 %s209, 1
          %s900 = smul.addr %s899, 4
          %s901 = scalar_lea.vmem [#allocation10], %s900
          %902 = dma.done %s898, 64
        $region84: #{tpu_custom_call.1} parent=79 // pred_fallthru
          _
        // Predicated region
        $region85: #{tpu_custom_call.1} parent=79 // pred_check
          %p903 = pneg %p252
        $region86: #{tpu_custom_call.1} parent=79 // pred_check_branch
          %905 = sbr.rel (%p903) target = $region88
        $region87: #{tpu_custom_call.1} parent=79 // pred_region
          %p906 = scmp.lt.s32.totalorder %s38, 1
          %s907 = scalar_select %p906, %s38, 1
          %p908 = scmp.lt.s32.totalorder %s39, 0
          %s909 = scalar_select %p908, %s39, 0
          %s910 = smul.addr %s907, 16
          %s911 = sadd.s32 %s909, %s910
          %s912 = smul.addr %s911, 4
          %s913 = scalar_lea.vmem %s8, %s912
        $region88: #{tpu_custom_call.1} parent=79 // pred_fallthru
          _
        // Predicated region
        $region89: #{tpu_custom_call.1} parent=79 // pred_check
          %p914 = pneg %p280
        $region90: #{tpu_custom_call.1} parent=79 // pred_check_branch
          %916 = sbr.rel (%p914) target = $region92
        $region91: #{tpu_custom_call.1} parent=79 // pred_region
          %s917 = sand.u32 %s265, 1
          %s918 = scalar_lea.sflag [#allocation12], %s917
          %s919 = sand.u32 %s265, 1
          %s920 = smul.addr %s919, 4
          %s921 = scalar_lea.vmem [#allocation11], %s920
          %922 = dma.done %s918, 64
        $region92: #{tpu_custom_call.1} parent=79 // pred_fallthru
          _
      $region80: #{tpu_custom_call.1} parent=5 // pred_fallthru
        _
    $region6: #{tpu_custom_call.1} parent=1 // loop_footer
      %s31 = sadd.s32 1, %s27
    $region7: #{tpu_custom_call.1} parent=1 // loop_footer_branch
      %26 = sbr.rel target = $region3
    $region8: #{tpu_custom_call.1} parent=1 // loop_exit
      _
    %923 = vsyncpa [#allocation3], 1
    %s924 = scalar_lea.sflag [#allocation3], 1
    %925 = vsyncpa %s924, 1
    %926 = vsyncpa [#allocation6], 1
    %927 = vsyncpa [#allocation9], 1
    %928 = vsyncpa [#allocation4], 1
    %s929 = scalar_lea.sflag [#allocation4], 1
    %930 = vsyncpa %s929, 1
    %931 = vsyncpa [#allocation12], 1
    %s932 = scalar_lea.sflag [#allocation12], 1
    %933 = vsyncpa %s932, 1

</llo_original>
